<compile_context>
chip_gen: v6e
topology: v6e:2x2x1
jax: 0.10.0
libtpu: 0.0.40
codegen_flags: <defaults>
</compile_context>

<pallas_src>
import jax
import jax.numpy as jnp
from jax.experimental import pallas as pl
from jax.experimental.pallas import tpu as pltpu

PAD = 128                      # padded feature width (lane dim)
DIMS = [(9, 70), (70, 70), (70, 70), (70, 70), (70, 2)]
NUM_LAYERS = len(DIMS)


def _round_up(x, m):
    return ((x + m - 1) // m) * m


def _mlp_kernel(x_ref, w_ref, b_ref, out_ref):
    # x_ref: (TB, 128) f32   w_ref: (5, 128, 128) bf16   b_ref: (8, 128) f32
    h = x_ref[...]                                        # f32 activations

    # fc1..fc4 + ReLU  (dropout1 after fc2, dropout2 after fc3: identity in eval)
    for i in range(NUM_LAYERS - 1):
        acc = jnp.dot(h.astype(jnp.bfloat16), w_ref[i],
                      preferred_element_type=jnp.float32)
        acc = acc + b_ref[pl.ds(i, 1), :]                 # (1,128) f32 bias broadcast
        h = jnp.maximum(acc, 0.0)

    # fc5 (logits live in lanes 0..1; padded lanes are exactly 0)
    logits = jnp.dot(h.astype(jnp.bfloat16), w_ref[NUM_LAYERS - 1],
                     preferred_element_type=jnp.float32)
    logits = logits + b_ref[pl.ds(NUM_LAYERS - 1, 1), :]

    # 2-class softmax == sigmoid of logit difference (avoids XLU reductions):
    #   p1 = 1 / (1 + exp(l0 - l1)),  p0 = 1 - p1
    l0 = logits[:, 0:1]
    l1 = logits[:, 1:2]
    p1 = pl.reciprocal(1.0 + jnp.exp(l0 - l1), approx=True)
    p0 = 1.0 - p1

    lane = jax.lax.broadcasted_iota(jnp.int32, out_ref.shape, 1)
    out = jnp.where(lane == 0, p0, jnp.where(lane == 1, p1, 0.0))
    out_ref[...] = out.astype(out_ref.dtype)


def mymodule12_forward(x, w_slab, b_slab, *, tb=256):
    """x: (B, 9) f32.  w_slab: (5,128,128) bf16.  b_slab: (8,128) f32.  -> (B, 2) f32."""
    B, F = x.shape
    TB = min(tb, _round_up(B, 8))                 # row tile (multiple of 8)
    B_pad = _round_up(B, TB)
    n_tiles = B_pad // TB

    # zero-pad batch rows and feature lanes once in the wrapper
    x_pad = jnp.zeros((B_pad, PAD), jnp.float32).at[:B, :F].set(x)

    out_pad = pl.pallas_call(
        _mlp_kernel,
        out_shape=jax.ShapeDtypeStruct((B_pad, PAD), jnp.float32),
        grid=(n_tiles,),
        in_specs=[
            pl.BlockSpec((TB, PAD), lambda i: (i, 0)),             # x: tiled over batch
            pl.BlockSpec((NUM_LAYERS, PAD, PAD), lambda i: (0, 0, 0)),  # weights: resident
            pl.BlockSpec((8, PAD), lambda i: (0, 0)),              # biases: resident
        ],
        out_specs=pl.BlockSpec((TB, PAD), lambda i: (i, 0)),
        compiler_params=pltpu.CompilerParams(
            dimension_semantics=("parallel",)),                    # 2 TCs on v7x
    )(x_pad, w_slab, b_slab)

    return out_pad[:B, :2]


def init_params(key):
    """Xavier-uniform weights, bias=0.1 (matches the PyTorch init_module default path).

    Returns (w_slab_bf16, b_slab_f32, raw_f32_params_for_reference)."""
    params = {}
    w_slab = jnp.zeros((NUM_LAYERS, PAD, PAD), jnp.float32)
    b_slab = jnp.zeros((8, PAD), jnp.float32)
    for i, (fan_in, fan_out) in enumerate(DIMS):
        key, kw = jax.random.split(key)
        limit = (6.0 / (fan_in + fan_out)) ** 0.5
        w = jax.random.uniform(kw, (fan_in, fan_out), jnp.float32, -limit, limit)
        b = jnp.full((fan_out,), 0.1, dtype=jnp.float32)
        params[f"w{i + 1}"] = w
        params[f"b{i + 1}"] = b
        w_slab = w_slab.at[i, :fan_in, :fan_out].set(w)
        b_slab = b_slab.at[i, :fan_out].set(b)
    return w_slab.astype(jnp.bfloat16), b_slab, params


def _reference_forward(x, params):
    """Pure-JAX f32 reference (eval-mode dropout = identity)."""
    h = x
    for i in range(1, NUM_LAYERS):
        h = jnp.maximum(h @ params[f"w{i}"] + params[f"b{i}"], 0.0)
    logits = h @ params[f"w{NUM_LAYERS}"] + params[f"b{NUM_LAYERS}"]
    return jax.nn.softmax(logits, axis=-1)


if __name__ == "__main__":
    key = jax.random.PRNGKey(0)
    key, kx = jax.random.split(key)
    B = 8
    x = jax.random.normal(kx, (B, 9), dtype=jnp.float32)

    w_slab, b_slab, ref_params = init_params(key)

    out = mymodule12_forward(x, w_slab, b_slab)
    out = jax.block_until_ready(out)

    ref = _reference_forward(x, ref_params)

    assert out.shape == (B, 2)
    # rows sum to exactly 1 by construction (p0 = 1 - p1)
    assert jnp.allclose(jnp.sum(out, axis=-1), 1.0, atol=1e-5)
    # bf16 matmul operands -> loose tolerance vs f32 reference
    assert jnp.allclose(out, ref, atol=2e-2), (out, ref)
    print("KERNEL_OK")
</pallas_src>

<mosaic_0001>
module attributes {stable_mosaic.version = 11 : i64} {
  func.func @_mlp_kernel(%arg0: i32, %arg1: memref<8x128xf32, #tpu.memory_space<vmem>>, %arg2: memref<5x128x128xbf16, #tpu.memory_space<vmem>>, %arg3: memref<8x128xf32, #tpu.memory_space<vmem>>, %arg4: memref<8x128xf32, #tpu.memory_space<vmem>>) attributes {dimension_semantics = [#tpu.dimension_semantics<parallel>], iteration_bounds = array<i64: 1>, scalar_prefetch = 0 : i64, scratch_operands = 0 : i64, tpu.core_type = #tpu.core_type<tc>, window_params = [{transform_indices = @transform_0, window_bounds = array<i64: 8, 128>}, {pipeline_mode = #tpu.pipeline_mode<synchronous>, transform_indices = @transform_1, window_bounds = array<i64: 5, 128, 128>}, {pipeline_mode = #tpu.pipeline_mode<synchronous>, transform_indices = @transform_2, window_bounds = array<i64: 8, 128>}, {transform_indices = @transform_3, window_bounds = array<i64: 8, 128>}]} {
    %c0 = arith.constant 0 : index
    %c0_0 = arith.constant 0 : index
    %0 = vector.load %arg1[%c0, %c0_0] : memref<8x128xf32, #tpu.memory_space<vmem>>, vector<8x128xf32>
    %1 = arith.truncf %0 : vector<8x128xf32> to vector<8x128xbf16>
    %c0_1 = arith.constant 0 : index
    %c0_2 = arith.constant 0 : index
    %c0_3 = arith.constant 0 : index
    %2 = vector.load %arg2[%c0_1, %c0_2, %c0_3] : memref<5x128x128xbf16, #tpu.memory_space<vmem>>, vector<1x128x128xbf16>
    %3 = vector.shape_cast %2 : vector<1x128x128xbf16> to vector<128x128xbf16>
    %cst = arith.constant dense<0.000000e+00> : vector<8x128xf32>
    %4 = tpu.matmul %1, %3, %cst {dimension_numbers = #tpu.dot_dimension_numbers<[1], [0], [0], [1], [0, 0, 1, 1], [], []>} : vector<8x128xbf16>, vector<128x128xbf16>, vector<8x128xf32> -> vector<8x128xf32>
    %c0_4 = arith.constant 0 : index
    %c0_5 = arith.constant 0 : index
    %5 = vector.load %arg3[%c0_4, %c0_5] : memref<8x128xf32, #tpu.memory_space<vmem>>, vector<1x128xf32>
    %6 = vector.broadcast %5 : vector<1x128xf32> to vector<8x128xf32>
    %7 = arith.addf %4, %6 : vector<8x128xf32>
    %cst_6 = arith.constant 0.000000e+00 : f32
    %8 = vector.broadcast %cst_6 : f32 to vector<8x128xf32>
    %9 = arith.maximumf %7, %8 : vector<8x128xf32>
    %10 = arith.truncf %9 : vector<8x128xf32> to vector<8x128xbf16>
    %c1 = arith.constant 1 : index
    %c0_7 = arith.constant 0 : index
    %c0_8 = arith.constant 0 : index
    %11 = vector.load %arg2[%c1, %c0_7, %c0_8] : memref<5x128x128xbf16, #tpu.memory_space<vmem>>, vector<1x128x128xbf16>
    %12 = vector.shape_cast %11 : vector<1x128x128xbf16> to vector<128x128xbf16>
    %cst_9 = arith.constant dense<0.000000e+00> : vector<8x128xf32>
    %13 = tpu.matmul %10, %12, %cst_9 {dimension_numbers = #tpu.dot_dimension_numbers<[1], [0], [0], [1], [0, 0, 1, 1], [], []>} : vector<8x128xbf16>, vector<128x128xbf16>, vector<8x128xf32> -> vector<8x128xf32>
    %c1_10 = arith.constant 1 : index
    %c0_11 = arith.constant 0 : index
    %14 = vector.load %arg3[%c1_10, %c0_11] : memref<8x128xf32, #tpu.memory_space<vmem>>, vector<1x128xf32>
    %15 = vector.broadcast %14 : vector<1x128xf32> to vector<8x128xf32>
    %16 = arith.addf %13, %15 : vector<8x128xf32>
    %cst_12 = arith.constant 0.000000e+00 : f32
    %17 = vector.broadcast %cst_12 : f32 to vector<8x128xf32>
    %18 = arith.maximumf %16, %17 : vector<8x128xf32>
    %19 = arith.truncf %18 : vector<8x128xf32> to vector<8x128xbf16>
    %c2 = arith.constant 2 : index
    %c0_13 = arith.constant 0 : index
    %c0_14 = arith.constant 0 : index
    %20 = vector.load %arg2[%c2, %c0_13, %c0_14] : memref<5x128x128xbf16, #tpu.memory_space<vmem>>, vector<1x128x128xbf16>
    %21 = vector.shape_cast %20 : vector<1x128x128xbf16> to vector<128x128xbf16>
    %cst_15 = arith.constant dense<0.000000e+00> : vector<8x128xf32>
    %22 = tpu.matmul %19, %21, %cst_15 {dimension_numbers = #tpu.dot_dimension_numbers<[1], [0], [0], [1], [0, 0, 1, 1], [], []>} : vector<8x128xbf16>, vector<128x128xbf16>, vector<8x128xf32> -> vector<8x128xf32>
    %c2_16 = arith.constant 2 : index
    %c0_17 = arith.constant 0 : index
    %23 = vector.load %arg3[%c2_16, %c0_17] : memref<8x128xf32, #tpu.memory_space<vmem>>, vector<1x128xf32>
    %24 = vector.broadcast %23 : vector<1x128xf32> to vector<8x128xf32>
    %25 = arith.addf %22, %24 : vector<8x128xf32>
    %cst_18 = arith.constant 0.000000e+00 : f32
    %26 = vector.broadcast %cst_18 : f32 to vector<8x128xf32>
    %27 = arith.maximumf %25, %26 : vector<8x128xf32>
    %28 = arith.truncf %27 : vector<8x128xf32> to vector<8x128xbf16>
    %c3 = arith.constant 3 : index
    %c0_19 = arith.constant 0 : index
    %c0_20 = arith.constant 0 : index
    %29 = vector.load %arg2[%c3, %c0_19, %c0_20] : memref<5x128x128xbf16, #tpu.memory_space<vmem>>, vector<1x128x128xbf16>
    %30 = vector.shape_cast %29 : vector<1x128x128xbf16> to vector<128x128xbf16>
    %cst_21 = arith.constant dense<0.000000e+00> : vector<8x128xf32>
    %31 = tpu.matmul %28, %30, %cst_21 {dimension_numbers = #tpu.dot_dimension_numbers<[1], [0], [0], [1], [0, 0, 1, 1], [], []>} : vector<8x128xbf16>, vector<128x128xbf16>, vector<8x128xf32> -> vector<8x128xf32>
    %c3_22 = arith.constant 3 : index
    %c0_23 = arith.constant 0 : index
    %32 = vector.load %arg3[%c3_22, %c0_23] : memref<8x128xf32, #tpu.memory_space<vmem>>, vector<1x128xf32>
    %33 = vector.broadcast %32 : vector<1x128xf32> to vector<8x128xf32>
    %34 = arith.addf %31, %33 : vector<8x128xf32>
    %cst_24 = arith.constant 0.000000e+00 : f32
    %35 = vector.broadcast %cst_24 : f32 to vector<8x128xf32>
    %36 = arith.maximumf %34, %35 : vector<8x128xf32>
    %37 = arith.truncf %36 : vector<8x128xf32> to vector<8x128xbf16>
    %c4 = arith.constant 4 : index
    %c0_25 = arith.constant 0 : index
    %c0_26 = arith.constant 0 : index
    %38 = vector.load %arg2[%c4, %c0_25, %c0_26] : memref<5x128x128xbf16, #tpu.memory_space<vmem>>, vector<1x128x128xbf16>
    %39 = vector.shape_cast %38 : vector<1x128x128xbf16> to vector<128x128xbf16>
    %cst_27 = arith.constant dense<0.000000e+00> : vector<8x128xf32>
    %40 = tpu.matmul %37, %39, %cst_27 {dimension_numbers = #tpu.dot_dimension_numbers<[1], [0], [0], [1], [0, 0, 1, 1], [], []>} : vector<8x128xbf16>, vector<128x128xbf16>, vector<8x128xf32> -> vector<8x128xf32>
    %c4_28 = arith.constant 4 : index
    %c0_29 = arith.constant 0 : index
    %41 = vector.load %arg3[%c4_28, %c0_29] : memref<8x128xf32, #tpu.memory_space<vmem>>, vector<1x128xf32>
    %42 = vector.broadcast %41 : vector<1x128xf32> to vector<8x128xf32>
    %43 = arith.addf %40, %42 : vector<8x128xf32>
    %44 = vector.extract_strided_slice %43 {offsets = [0, 0], sizes = [8, 1], strides = [1, 1]} : vector<8x128xf32> to vector<8x1xf32>
    %45 = vector.extract_strided_slice %43 {offsets = [0, 1], sizes = [8, 1], strides = [1, 1]} : vector<8x128xf32> to vector<8x1xf32>
    %46 = arith.subf %44, %45 : vector<8x1xf32>
    %47 = math.exp %46 : vector<8x1xf32>
    %cst_30 = arith.constant 1.000000e+00 : f32
    %48 = vector.broadcast %cst_30 : f32 to vector<8x1xf32>
    %49 = arith.addf %48, %47 : vector<8x1xf32>
    %50 = tpu.reciprocal %49 {approx = true} : vector<8x1xf32> -> vector<8x1xf32>
    %cst_31 = arith.constant 1.000000e+00 : f32
    %51 = vector.broadcast %cst_31 : f32 to vector<8x1xf32>
    %52 = arith.subf %51, %50 : vector<8x1xf32>
    %53 = tpu.iota {dimensions = array<i32: 1>} : vector<8x128xi32>
    %c0_i32 = arith.constant 0 : i32
    %54 = vector.broadcast %c0_i32 : i32 to vector<8x128xi32>
    %55 = arith.cmpi eq, %53, %54 : vector<8x128xi32>
    %c1_i32 = arith.constant 1 : i32
    %56 = vector.broadcast %c1_i32 : i32 to vector<8x128xi32>
    %57 = arith.cmpi eq, %53, %56 : vector<8x128xi32>
    %cst_32 = arith.constant 0.000000e+00 : f32
    %58 = vector.shape_cast %50 : vector<8x1xf32> to vector<8x1xf32>
    %59 = vector.broadcast %58 : vector<8x1xf32> to vector<8x128xf32>
    %60 = vector.broadcast %cst_32 : f32 to vector<8x128xf32>
    %61 = arith.select %57, %59, %60 : vector<8x128xi1>, vector<8x128xf32>
    %62 = vector.shape_cast %52 : vector<8x1xf32> to vector<8x1xf32>
    %63 = vector.broadcast %62 : vector<8x1xf32> to vector<8x128xf32>
    %64 = arith.select %55, %63, %61 : vector<8x128xi1>, vector<8x128xf32>
    %c0_33 = arith.constant 0 : index
    %c0_34 = arith.constant 0 : index
    %65 = vector.load %arg4[%c0_33, %c0_34] : memref<8x128xf32, #tpu.memory_space<vmem>>, vector<8x128xf32>
    tpu.vector_store %arg4[%c0_33, %c0_34], %64 {strides = array<i32>} : memref<8x128xf32, #tpu.memory_space<vmem>>, vector<8x128xf32>,
    return
  }
  func.func @transform_0(%arg0: i32) -> (i32, i32) {
    %c0_i32 = arith.constant 0 : i32
    %c0_i32_0 = arith.constant 0 : i32
    return %arg0, %c0_i32 : i32, i32
  }
  func.func @transform_1(%arg0: i32) -> (i32, i32, i32) {
    %c0_i32 = arith.constant 0 : i32
    %c0_i32_0 = arith.constant 0 : i32
    %c0_i32_1 = arith.constant 0 : i32
    %c0_i32_2 = arith.constant 0 : i32
    return %c0_i32, %c0_i32_0, %c0_i32_1 : i32, i32, i32
  }
  func.func @transform_2(%arg0: i32) -> (i32, i32) {
    %c0_i32 = arith.constant 0 : i32
    %c0_i32_0 = arith.constant 0 : i32
    %c0_i32_1 = arith.constant 0 : i32
    return %c0_i32, %c0_i32_0 : i32, i32
  }
  func.func @transform_3(%arg0: i32) -> (i32, i32) {
    %c0_i32 = arith.constant 0 : i32
    %c0_i32_0 = arith.constant 0 : i32
    return %arg0, %c0_i32 : i32, i32
  }
}

</mosaic_0001>

<llo_original>
// kernel: tpu_custom_call.1
$region0: #{tpu_custom_call.1}
  #allocation0 [shape = 'u32[]', space=smem, size = 0x4, offset = 0x4, fixed_abs, tag = 'smem constant byte address 0x4 - core index']
  #allocation1 [shape = 'u32[144,128]{1,0:T(1,128)}', space=vmem, size = 0x12000, scoped, tag = 'internal scratch']
  %s0 = inlined_call_operand.hbm [shape: f32[8,128], index: 0, kind: input, shape index: {}]
  %s1 = inlined_call_operand.hbm [shape: bf16[5,128,128], index: 1, kind: input, shape index: {}]
  %s2 = inlined_call_operand.hbm [shape: f32[8,128], index: 2, kind: input, shape index: {}]
  %s3 = inlined_call_operand.hbm [shape: f32[8,128], index: 3, kind: output, shape index: {}]
  %s4 = sld [smem:[#allocation0]]
  $region34: #{tpu_custom_call.1} parent=0
    _
  %s6 = ssub.s32 1, %s4
  %s7 = scalar_select 0, %s6, %s4
  $region1: #{tpu_custom_call.1} parent=0
    #allocation2 [shape = 'u8[4096]{0}', space=vmem, size = 0x1000, scoped, tag = 'input window, operand 0, single buffered']
    #allocation3 [shape = 's32[1]{0}', space=sflag, size = 0x4, scoped, tag = 'scoped memory for tpu_custom_call.1']
    #allocation4 [shape = 's32[1]{0}', space=sflag, size = 0x4, scoped, tag = 'scoped memory for tpu_custom_call.1']
    #allocation5 [shape = 'u8[163840]{0}', space=vmem, size = 0x28000, scoped, tag = 'input window, operand 1, single buffered']
    #allocation6 [shape = 's32[1]{0}', space=sflag, size = 0x4, scoped, tag = 'scoped memory for tpu_custom_call.1']
    #allocation7 [shape = 'u8[4096]{0}', space=vmem, size = 0x1000, scoped, tag = 'input window, operand 2, single buffered']
    #allocation8 [shape = 'u8[4096]{0}', space=vmem, size = 0x1000, scoped, tag = 'output window, operand 0, single buffered']
    %8 = vsyncpa [#allocation3], 0
    %9 = vsyncpa [#allocation6], 0
    %10 = vsyncpa [#allocation4], 0
    // Predicated region
    $region2: #{tpu_custom_call.1} parent=1 // pred_check
      _
    $region3: #{tpu_custom_call.1} parent=1 // pred_check_branch
      %12 = sbr.rel (0) target = $region5
    $region4: #{tpu_custom_call.1} parent=1 // pred_region
      %s14 = ssub.s32 128, 128
      %15 = vsyncadd [#allocation3], %s14
      %s17 = sshll.u32 [#allocation2], 4
      %s18 = int_to_ptr.vmem [resolvable:$true] %s17
      %20 = dma.hbm_to_vmem [thread:$0]  %s0, 128, %s18, [#allocation3]
    $region5: #{tpu_custom_call.1} parent=1 // pred_fallthru
      _
    // Predicated region
    $region6: #{tpu_custom_call.1} parent=1 // pred_check
      _
    $region7: #{tpu_custom_call.1} parent=1 // pred_check_branch
      %22 = sbr.rel (0) target = $region9
    $region8: #{tpu_custom_call.1} parent=1 // pred_region
      %s24 = ssub.s32 5120, 5120
      %25 = vsyncadd [#allocation6], %s24
      %s26 = sshll.u32 [#allocation5], 4
      %s27 = int_to_ptr.vmem [resolvable:$true] %s26
      %32 = dma.hbm_to_vmem [thread:$0]  %s1, 5120, %s27, [#allocation6], 64, 64, 4
    $region9: #{tpu_custom_call.1} parent=1 // pred_fallthru
      _
    // Predicated region
    $region10: #{tpu_custom_call.1} parent=1 // pred_check
      _
    $region11: #{tpu_custom_call.1} parent=1 // pred_check_branch
      %34 = sbr.rel (0) target = $region13
    $region12: #{tpu_custom_call.1} parent=1 // pred_region
      %s36 = ssub.s32 128, 128
      %37 = vsyncadd [#allocation6], %s36
      %s39 = sshll.u32 [#allocation7], 4
      %s40 = int_to_ptr.vmem [resolvable:$true] %s39
      %42 = dma.hbm_to_vmem [thread:$0]  %s2, 128, %s40, [#allocation6]
    $region13: #{tpu_custom_call.1} parent=1 // pred_fallthru
      _
    // Predicated region
    $region14: #{tpu_custom_call.1} parent=1 // pred_check
      _
    $region15: #{tpu_custom_call.1} parent=1 // pred_check_branch
      %44 = sbr.rel (0) target = $region17
    $region16: #{tpu_custom_call.1} parent=1 // pred_region
      %45 = dma.done [#allocation3], 128
    $region17: #{tpu_custom_call.1} parent=1 // pred_fallthru
      _
    // Predicated region
    $region18: #{tpu_custom_call.1} parent=1 // pred_check
      _
    $region19: #{tpu_custom_call.1} parent=1 // pred_check_branch
      %47 = sbr.rel (0) target = $region21
    $region20: #{tpu_custom_call.1} parent=1 // pred_region
      %48 = dma.done [#allocation6], 5120
    $region21: #{tpu_custom_call.1} parent=1 // pred_fallthru
      _
    // Predicated region
    $region22: #{tpu_custom_call.1} parent=1 // pred_check
      _
    $region23: #{tpu_custom_call.1} parent=1 // pred_check_branch
      %50 = sbr.rel (0) target = $region25
    $region24: #{tpu_custom_call.1} parent=1 // pred_region
      %51 = dma.done [#allocation6], 128
    $region25: #{tpu_custom_call.1} parent=1 // pred_fallthru
      _
    %v53 = vld [vmem:[#allocation2] sm:$0xff]
    %v54 = vpack.c.bf16 %v53, %v53
    %v55 = vld [vmem:[#allocation5] sm:$0xf]
    %v56 = vld [vmem:[#allocation5 + $0x4] sm:$0xf]
    %v57 = vld [vmem:[#allocation5 + $0x8] sm:$0xf]
    %v58 = vld [vmem:[#allocation5 + $0xc] sm:$0xf]
    %v59 = vld [vmem:[#allocation5 + $0x10] sm:$0xf]
    %v60 = vld [vmem:[#allocation5 + $0x14] sm:$0xf]
    %v61 = vld [vmem:[#allocation5 + $0x18] sm:$0xf]
    %v62 = vld [vmem:[#allocation5 + $0x1c] sm:$0xf]
    %v63 = vld [vmem:[#allocation5 + $0x20] sm:$0xf]
    %v64 = vld [vmem:[#allocation5 + $0x24] sm:$0xf]
    %v65 = vld [vmem:[#allocation5 + $0x28] sm:$0xf]
    %v66 = vld [vmem:[#allocation5 + $0x2c] sm:$0xf]
    %v67 = vld [vmem:[#allocation5 + $0x30] sm:$0xf]
    %v68 = vld [vmem:[#allocation5 + $0x34] sm:$0xf]
    %v69 = vld [vmem:[#allocation5 + $0x38] sm:$0xf]
    %v70 = vld [vmem:[#allocation5 + $0x3c] sm:$0xf]
    %v71 = vld [vmem:[#allocation7] sm:$0x1]
    %v72 = vlaneseq
    %v73 = vshrl.u32 %v72, 7
    %v74 = vsub.s32 0, %v73
    %v75 = vrot.slane %v71, %v74
    %v92 = vunpack.c.l.b16 %v55
    %v93 = vunpack.c.l.b16 %v56
    %v94 = vunpack.c.l.b16 %v57
    %v95 = vunpack.c.l.b16 %v58
    %v96 = vunpack.c.l.b16 %v59
    %v97 = vunpack.c.l.b16 %v60
    %v98 = vunpack.c.l.b16 %v61
    %v99 = vunpack.c.l.b16 %v62
    %v100 = vunpack.c.l.b16 %v63
    %v101 = vunpack.c.l.b16 %v64
    %v102 = vunpack.c.l.b16 %v65
    %v103 = vunpack.c.l.b16 %v66
    %v104 = vunpack.c.l.b16 %v67
    %v105 = vunpack.c.l.b16 %v68
    %v106 = vunpack.c.l.b16 %v69
    %v107 = vunpack.c.l.b16 %v70
    %v108 = vpack.c.b16 %v93, %v92
    %v109 = vpack.c.b16 %v95, %v94
    %v110 = vpack.c.b16 %v97, %v96
    %v111 = vpack.c.b16 %v99, %v98
    %v112 = vpack.c.b16 %v101, %v100
    %v113 = vpack.c.b16 %v103, %v102
    %v114 = vpack.c.b16 %v105, %v104
    %v115 = vpack.c.b16 %v107, %v106
    %124 = vmatprep.subr.bf16.mxu0 0
    %125 = vmatpush1.bf16.msra.mxu0 %v115
    %126 = vmatprep.subr.bf16.mxu0 0
    %127 = vmatpush1.bf16.msra.mxu0 %v114
    %128 = vmatprep.subr.bf16.mxu0 0
    %129 = vmatpush1.bf16.msra.mxu0 %v113
    %130 = vmatprep.subr.bf16.mxu0 0
    %131 = vmatpush1.bf16.msra.mxu0 %v112
    %132 = vmatprep.subr.bf16.mxu0 0
    %133 = vmatpush1.bf16.msra.mxu0 %v111
    %134 = vmatprep.subr.bf16.mxu0 0
    %135 = vmatpush1.bf16.msra.mxu0 %v110
    %136 = vmatprep.subr.bf16.mxu0 0
    %137 = vmatpush1.bf16.msra.mxu0 %v109
    %138 = vmatprep.subr.bf16.mxu0 0
    %139 = vmatpush1.bf16.msra.mxu0 %v108
    %140 = vmatprep.subr.bf16.mxu0 0
    %141 = vmatpush2.bf16.msra.mxu0 0
    %142 = vmatprep.subr.bf16.mxu0 0
    %143 = vmatpush2.bf16.msra.mxu0 0
    %144 = vmatprep.subr.bf16.mxu0 0
    %145 = vmatpush2.bf16.msra.mxu0 0
    %146 = vmatprep.subr.bf16.mxu0 0
    %147 = vmatpush2.bf16.msra.mxu0 0
    %148 = vmatprep.subr.bf16.mxu0 0
    %149 = vmatpush2.bf16.msra.mxu0 0
    %150 = vmatprep.subr.bf16.mxu0 0
    %151 = vmatpush2.bf16.msra.mxu0 0
    %152 = vmatprep.subr.bf16.mxu0 0
    %153 = vmatpush2.bf16.msra.mxu0 0
    %154 = vmatprep.subr.bf16.mxu0 0
    %155 = vmatpush2.bf16.msra.mxu0 0
    %156 = vmatprep.mubr.bf16.mxu0 0
    %157 = vmatmul.mubr.bf16.gmra.mxu0 %v54
    %v158 = vpop.f32.mrf.mxu0
    %v159 = vadd.f32 %v75, %v158
    %v160 = vpop.f32.mrf.mxu0
    %v161 = vpop.f32.mrf.mxu0
    %v162 = vpop.f32.mrf.mxu0
    %163 = vdwg.mxu0
    %v164 = vmax.f32 %v159, 0.0
    %v165 = vpack.c.bf16 %v164, %v164
    %s166 = scalar_lea.vmem [#allocation5], 64
    %v167 = vld [vmem:[%s166] sm:$0xf]
    %v168 = vld [vmem:[%s166 + $0x4] sm:$0xf]
    %v169 = vld [vmem:[%s166 + $0x8] sm:$0xf]
    %v170 = vld [vmem:[%s166 + $0xc] sm:$0xf]
    %v171 = vld [vmem:[%s166 + $0x10] sm:$0xf]
    %v172 = vld [vmem:[%s166 + $0x14] sm:$0xf]
    %v173 = vld [vmem:[%s166 + $0x18] sm:$0xf]
    %v174 = vld [vmem:[%s166 + $0x1c] sm:$0xf]
    %v175 = vld [vmem:[%s166 + $0x20] sm:$0xf]
    %v176 = vld [vmem:[%s166 + $0x24] sm:$0xf]
    %v177 = vld [vmem:[%s166 + $0x28] sm:$0xf]
    %v178 = vld [vmem:[%s166 + $0x2c] sm:$0xf]
    %v179 = vld [vmem:[%s166 + $0x30] sm:$0xf]
    %v180 = vld [vmem:[%s166 + $0x34] sm:$0xf]
    %v181 = vld [vmem:[%s166 + $0x38] sm:$0xf]
    %v182 = vld [vmem:[%s166 + $0x3c] sm:$0xf]
    %v183 = vld [vmem:[#allocation7 + $0x1] sm:$0x1]
    %v184 = vlaneseq
    %v185 = vshrl.u32 %v184, 7
    %v186 = vsub.s32 0, %v185
    %v187 = vrot.slane %v183, %v186
    %v204 = vunpack.c.l.b16 %v167
    %v205 = vunpack.c.l.b16 %v168
    %v206 = vunpack.c.l.b16 %v169
    %v207 = vunpack.c.l.b16 %v170
    %v208 = vunpack.c.l.b16 %v171
    %v209 = vunpack.c.l.b16 %v172
    %v210 = vunpack.c.l.b16 %v173
    %v211 = vunpack.c.l.b16 %v174
    %v212 = vunpack.c.l.b16 %v175
    %v213 = vunpack.c.l.b16 %v176
    %v214 = vunpack.c.l.b16 %v177
    %v215 = vunpack.c.l.b16 %v178
    %v216 = vunpack.c.l.b16 %v179
    %v217 = vunpack.c.l.b16 %v180
    %v218 = vunpack.c.l.b16 %v181
    %v219 = vunpack.c.l.b16 %v182
    %v220 = vpack.c.b16 %v205, %v204
    %v221 = vpack.c.b16 %v207, %v206
    %v222 = vpack.c.b16 %v209, %v208
    %v223 = vpack.c.b16 %v211, %v210
    %v224 = vpack.c.b16 %v213, %v212
    %v225 = vpack.c.b16 %v215, %v214
    %v226 = vpack.c.b16 %v217, %v216
    %v227 = vpack.c.b16 %v219, %v218
    %236 = vmatprep.subr.bf16.mxu0 0
    %237 = vmatpush1.bf16.msra.mxu0 %v227
    %238 = vmatprep.subr.bf16.mxu0 0
    %239 = vmatpush1.bf16.msra.mxu0 %v226
    %240 = vmatprep.subr.bf16.mxu0 0
    %241 = vmatpush1.bf16.msra.mxu0 %v225
    %242 = vmatprep.subr.bf16.mxu0 0
    %243 = vmatpush1.bf16.msra.mxu0 %v224
    %244 = vmatprep.subr.bf16.mxu0 0
    %245 = vmatpush1.bf16.msra.mxu0 %v223
    %246 = vmatprep.subr.bf16.mxu0 0
    %247 = vmatpush1.bf16.msra.mxu0 %v222
    %248 = vmatprep.subr.bf16.mxu0 0
    %249 = vmatpush1.bf16.msra.mxu0 %v221
    %250 = vmatprep.subr.bf16.mxu0 0
    %251 = vmatpush1.bf16.msra.mxu0 %v220
    %252 = vmatprep.subr.bf16.mxu0 0
    %253 = vmatpush2.bf16.msra.mxu0 0
    %254 = vmatprep.subr.bf16.mxu0 0
    %255 = vmatpush2.bf16.msra.mxu0 0
    %256 = vmatprep.subr.bf16.mxu0 0
    %257 = vmatpush2.bf16.msra.mxu0 0
    %258 = vmatprep.subr.bf16.mxu0 0
    %259 = vmatpush2.bf16.msra.mxu0 0
    %260 = vmatprep.subr.bf16.mxu0 0
    %261 = vmatpush2.bf16.msra.mxu0 0
    %262 = vmatprep.subr.bf16.mxu0 0
    %263 = vmatpush2.bf16.msra.mxu0 0
    %264 = vmatprep.subr.bf16.mxu0 0
    %265 = vmatpush2.bf16.msra.mxu0 0
    %266 = vmatprep.subr.bf16.mxu0 0
    %267 = vmatpush2.bf16.msra.mxu0 0
    %268 = vmatprep.mubr.bf16.mxu0 0
    %269 = vmatmul.mubr.bf16.gmra.mxu0 %v165
    %v270 = vpop.f32.mrf.mxu0
    %v271 = vadd.f32 %v187, %v270
    %v272 = vpop.f32.mrf.mxu0
    %v273 = vpop.f32.mrf.mxu0
    %v274 = vpop.f32.mrf.mxu0
    %275 = vdwg.mxu0
    %v276 = vmax.f32 %v271, 0.0
    %v277 = vpack.c.bf16 %v276, %v276
    %s278 = scalar_lea.vmem [#allocation5], 128
    %v279 = vld [vmem:[%s278] sm:$0xf]
    %v280 = vld [vmem:[%s278 + $0x4] sm:$0xf]
    %v281 = vld [vmem:[%s278 + $0x8] sm:$0xf]
    %v282 = vld [vmem:[%s278 + $0xc] sm:$0xf]
    %v283 = vld [vmem:[%s278 + $0x10] sm:$0xf]
    %v284 = vld [vmem:[%s278 + $0x14] sm:$0xf]
    %v285 = vld [vmem:[%s278 + $0x18] sm:$0xf]
    %v286 = vld [vmem:[%s278 + $0x1c] sm:$0xf]
    %v287 = vld [vmem:[%s278 + $0x20] sm:$0xf]
    %v288 = vld [vmem:[%s278 + $0x24] sm:$0xf]
    %v289 = vld [vmem:[%s278 + $0x28] sm:$0xf]
    %v290 = vld [vmem:[%s278 + $0x2c] sm:$0xf]
    %v291 = vld [vmem:[%s278 + $0x30] sm:$0xf]
    %v292 = vld [vmem:[%s278 + $0x34] sm:$0xf]
    %v293 = vld [vmem:[%s278 + $0x38] sm:$0xf]
    %v294 = vld [vmem:[%s278 + $0x3c] sm:$0xf]
    %v295 = vld [vmem:[#allocation7 + $0x2] sm:$0x1]
    %v296 = vlaneseq
    %v297 = vshrl.u32 %v296, 7
    %v298 = vsub.s32 0, %v297
    %v299 = vrot.slane %v295, %v298
    %v316 = vunpack.c.l.b16 %v279
    %v317 = vunpack.c.l.b16 %v280
    %v318 = vunpack.c.l.b16 %v281
    %v319 = vunpack.c.l.b16 %v282
    %v320 = vunpack.c.l.b16 %v283
    %v321 = vunpack.c.l.b16 %v284
    %v322 = vunpack.c.l.b16 %v285
    %v323 = vunpack.c.l.b16 %v286
    %v324 = vunpack.c.l.b16 %v287
    %v325 = vunpack.c.l.b16 %v288
    %v326 = vunpack.c.l.b16 %v289
    %v327 = vunpack.c.l.b16 %v290
    %v328 = vunpack.c.l.b16 %v291
    %v329 = vunpack.c.l.b16 %v292
    %v330 = vunpack.c.l.b16 %v293
    %v331 = vunpack.c.l.b16 %v294
    %v332 = vpack.c.b16 %v317, %v316
    %v333 = vpack.c.b16 %v319, %v318
    %v334 = vpack.c.b16 %v321, %v320
    %v335 = vpack.c.b16 %v323, %v322
    %v336 = vpack.c.b16 %v325, %v324
    %v337 = vpack.c.b16 %v327, %v326
    %v338 = vpack.c.b16 %v329, %v328
    %v339 = vpack.c.b16 %v331, %v330
    %348 = vmatprep.subr.bf16.mxu0 0
    %349 = vmatpush1.bf16.msra.mxu0 %v339
    %350 = vmatprep.subr.bf16.mxu0 0
    %351 = vmatpush1.bf16.msra.mxu0 %v338
    %352 = vmatprep.subr.bf16.mxu0 0
    %353 = vmatpush1.bf16.msra.mxu0 %v337
    %354 = vmatprep.subr.bf16.mxu0 0
    %355 = vmatpush1.bf16.msra.mxu0 %v336
    %356 = vmatprep.subr.bf16.mxu0 0
    %357 = vmatpush1.bf16.msra.mxu0 %v335
    %358 = vmatprep.subr.bf16.mxu0 0
    %359 = vmatpush1.bf16.msra.mxu0 %v334
    %360 = vmatprep.subr.bf16.mxu0 0
    %361 = vmatpush1.bf16.msra.mxu0 %v333
    %362 = vmatprep.subr.bf16.mxu0 0
    %363 = vmatpush1.bf16.msra.mxu0 %v332
    %364 = vmatprep.subr.bf16.mxu0 0
    %365 = vmatpush2.bf16.msra.mxu0 0
    %366 = vmatprep.subr.bf16.mxu0 0
    %367 = vmatpush2.bf16.msra.mxu0 0
    %368 = vmatprep.subr.bf16.mxu0 0
    %369 = vmatpush2.bf16.msra.mxu0 0
    %370 = vmatprep.subr.bf16.mxu0 0
    %371 = vmatpush2.bf16.msra.mxu0 0
    %372 = vmatprep.subr.bf16.mxu0 0
    %373 = vmatpush2.bf16.msra.mxu0 0
    %374 = vmatprep.subr.bf16.mxu0 0
    %375 = vmatpush2.bf16.msra.mxu0 0
    %376 = vmatprep.subr.bf16.mxu0 0
    %377 = vmatpush2.bf16.msra.mxu0 0
    %378 = vmatprep.subr.bf16.mxu0 0
    %379 = vmatpush2.bf16.msra.mxu0 0
    %380 = vmatprep.mubr.bf16.mxu0 0
    %381 = vmatmul.mubr.bf16.gmra.mxu0 %v277
    %v382 = vpop.f32.mrf.mxu0
    %v383 = vadd.f32 %v299, %v382
    %v384 = vpop.f32.mrf.mxu0
    %v385 = vpop.f32.mrf.mxu0
    %v386 = vpop.f32.mrf.mxu0
    %387 = vdwg.mxu0
    %v388 = vmax.f32 %v383, 0.0
    %v389 = vpack.c.bf16 %v388, %v388
    %s390 = scalar_lea.vmem [#allocation5], 192
    %v391 = vld [vmem:[%s390] sm:$0xf]
    %v392 = vld [vmem:[%s390 + $0x4] sm:$0xf]
    %v393 = vld [vmem:[%s390 + $0x8] sm:$0xf]
    %v394 = vld [vmem:[%s390 + $0xc] sm:$0xf]
    %v395 = vld [vmem:[%s390 + $0x10] sm:$0xf]
    %v396 = vld [vmem:[%s390 + $0x14] sm:$0xf]
    %v397 = vld [vmem:[%s390 + $0x18] sm:$0xf]
    %v398 = vld [vmem:[%s390 + $0x1c] sm:$0xf]
    %v399 = vld [vmem:[%s390 + $0x20] sm:$0xf]
    %v400 = vld [vmem:[%s390 + $0x24] sm:$0xf]
    %v401 = vld [vmem:[%s390 + $0x28] sm:$0xf]
    %v402 = vld [vmem:[%s390 + $0x2c] sm:$0xf]
    %v403 = vld [vmem:[%s390 + $0x30] sm:$0xf]
    %v404 = vld [vmem:[%s390 + $0x34] sm:$0xf]
    %v405 = vld [vmem:[%s390 + $0x38] sm:$0xf]
    %v406 = vld [vmem:[%s390 + $0x3c] sm:$0xf]
    %v407 = vld [vmem:[#allocation7 + $0x3] sm:$0x1]
    %v408 = vlaneseq
    %v409 = vshrl.u32 %v408, 7
    %v410 = vsub.s32 0, %v409
    %v411 = vrot.slane %v407, %v410
    %v428 = vunpack.c.l.b16 %v391
    %v429 = vunpack.c.l.b16 %v392
    %v430 = vunpack.c.l.b16 %v393
    %v431 = vunpack.c.l.b16 %v394
    %v432 = vunpack.c.l.b16 %v395
    %v433 = vunpack.c.l.b16 %v396
    %v434 = vunpack.c.l.b16 %v397
    %v435 = vunpack.c.l.b16 %v398
    %v436 = vunpack.c.l.b16 %v399
    %v437 = vunpack.c.l.b16 %v400
    %v438 = vunpack.c.l.b16 %v401
    %v439 = vunpack.c.l.b16 %v402
    %v440 = vunpack.c.l.b16 %v403
    %v441 = vunpack.c.l.b16 %v404
    %v442 = vunpack.c.l.b16 %v405
    %v443 = vunpack.c.l.b16 %v406
    %v444 = vpack.c.b16 %v429, %v428
    %v445 = vpack.c.b16 %v431, %v430
    %v446 = vpack.c.b16 %v433, %v432
    %v447 = vpack.c.b16 %v435, %v434
    %v448 = vpack.c.b16 %v437, %v436
    %v449 = vpack.c.b16 %v439, %v438
    %v450 = vpack.c.b16 %v441, %v440
    %v451 = vpack.c.b16 %v443, %v442
    %460 = vmatprep.subr.bf16.mxu0 0
    %461 = vmatpush1.bf16.msra.mxu0 %v451
    %462 = vmatprep.subr.bf16.mxu0 0
    %463 = vmatpush1.bf16.msra.mxu0 %v450
    %464 = vmatprep.subr.bf16.mxu0 0
    %465 = vmatpush1.bf16.msra.mxu0 %v449
    %466 = vmatprep.subr.bf16.mxu0 0
    %467 = vmatpush1.bf16.msra.mxu0 %v448
    %468 = vmatprep.subr.bf16.mxu0 0
    %469 = vmatpush1.bf16.msra.mxu0 %v447
    %470 = vmatprep.subr.bf16.mxu0 0
    %471 = vmatpush1.bf16.msra.mxu0 %v446
    %472 = vmatprep.subr.bf16.mxu0 0
    %473 = vmatpush1.bf16.msra.mxu0 %v445
    %474 = vmatprep.subr.bf16.mxu0 0
    %475 = vmatpush1.bf16.msra.mxu0 %v444
    %476 = vmatprep.subr.bf16.mxu0 0
    %477 = vmatpush2.bf16.msra.mxu0 0
    %478 = vmatprep.subr.bf16.mxu0 0
    %479 = vmatpush2.bf16.msra.mxu0 0
    %480 = vmatprep.subr.bf16.mxu0 0
    %481 = vmatpush2.bf16.msra.mxu0 0
    %482 = vmatprep.subr.bf16.mxu0 0
    %483 = vmatpush2.bf16.msra.mxu0 0
    %484 = vmatprep.subr.bf16.mxu0 0
    %485 = vmatpush2.bf16.msra.mxu0 0
    %486 = vmatprep.subr.bf16.mxu0 0
    %487 = vmatpush2.bf16.msra.mxu0 0
    %488 = vmatprep.subr.bf16.mxu0 0
    %489 = vmatpush2.bf16.msra.mxu0 0
    %490 = vmatprep.subr.bf16.mxu0 0
    %491 = vmatpush2.bf16.msra.mxu0 0
    %492 = vmatprep.mubr.bf16.mxu0 0
    %493 = vmatmul.mubr.bf16.gmra.mxu0 %v389
    %v494 = vpop.f32.mrf.mxu0
    %v495 = vadd.f32 %v411, %v494
    %v496 = vpop.f32.mrf.mxu0
    %v497 = vpop.f32.mrf.mxu0
    %v498 = vpop.f32.mrf.mxu0
    %499 = vdwg.mxu0
    %v500 = vmax.f32 %v495, 0.0
    %v501 = vpack.c.bf16 %v500, %v500
    %s502 = scalar_lea.vmem [#allocation5], 256
    %v503 = vld [vmem:[%s502] sm:$0xf]
    %v504 = vld [vmem:[%s502 + $0x4] sm:$0xf]
    %v505 = vld [vmem:[%s502 + $0x8] sm:$0xf]
    %v506 = vld [vmem:[%s502 + $0xc] sm:$0xf]
    %v507 = vld [vmem:[%s502 + $0x10] sm:$0xf]
    %v508 = vld [vmem:[%s502 + $0x14] sm:$0xf]
    %v509 = vld [vmem:[%s502 + $0x18] sm:$0xf]
    %v510 = vld [vmem:[%s502 + $0x1c] sm:$0xf]
    %v511 = vld [vmem:[%s502 + $0x20] sm:$0xf]
    %v512 = vld [vmem:[%s502 + $0x24] sm:$0xf]
    %v513 = vld [vmem:[%s502 + $0x28] sm:$0xf]
    %v514 = vld [vmem:[%s502 + $0x2c] sm:$0xf]
    %v515 = vld [vmem:[%s502 + $0x30] sm:$0xf]
    %v516 = vld [vmem:[%s502 + $0x34] sm:$0xf]
    %v517 = vld [vmem:[%s502 + $0x38] sm:$0xf]
    %v518 = vld [vmem:[%s502 + $0x3c] sm:$0xf]
    %v519 = vld [vmem:[#allocation7 + $0x4] sm:$0x1]
    %v520 = vlaneseq
    %v521 = vshrl.u32 %v520, 7
    %v522 = vsub.s32 0, %v521
    %v523 = vrot.slane %v519, %v522
    %v540 = vunpack.c.l.b16 %v503
    %v541 = vunpack.c.l.b16 %v504
    %v542 = vunpack.c.l.b16 %v505
    %v543 = vunpack.c.l.b16 %v506
    %v544 = vunpack.c.l.b16 %v507
    %v545 = vunpack.c.l.b16 %v508
    %v546 = vunpack.c.l.b16 %v509
    %v547 = vunpack.c.l.b16 %v510
    %v548 = vunpack.c.l.b16 %v511
    %v549 = vunpack.c.l.b16 %v512
    %v550 = vunpack.c.l.b16 %v513
    %v551 = vunpack.c.l.b16 %v514
    %v552 = vunpack.c.l.b16 %v515
    %v553 = vunpack.c.l.b16 %v516
    %v554 = vunpack.c.l.b16 %v517
    %v555 = vunpack.c.l.b16 %v518
    %v556 = vpack.c.b16 %v541, %v540
    %v557 = vpack.c.b16 %v543, %v542
    %v558 = vpack.c.b16 %v545, %v544
    %v559 = vpack.c.b16 %v547, %v546
    %v560 = vpack.c.b16 %v549, %v548
    %v561 = vpack.c.b16 %v551, %v550
    %v562 = vpack.c.b16 %v553, %v552
    %v563 = vpack.c.b16 %v555, %v554
    %572 = vmatprep.subr.bf16.mxu0 0
    %573 = vmatpush1.bf16.msra.mxu0 %v563
    %574 = vmatprep.subr.bf16.mxu0 0
    %575 = vmatpush1.bf16.msra.mxu0 %v562
    %576 = vmatprep.subr.bf16.mxu0 0
    %577 = vmatpush1.bf16.msra.mxu0 %v561
    %578 = vmatprep.subr.bf16.mxu0 0
    %579 = vmatpush1.bf16.msra.mxu0 %v560
    %580 = vmatprep.subr.bf16.mxu0 0
    %581 = vmatpush1.bf16.msra.mxu0 %v559
    %582 = vmatprep.subr.bf16.mxu0 0
    %583 = vmatpush1.bf16.msra.mxu0 %v558
    %584 = vmatprep.subr.bf16.mxu0 0
    %585 = vmatpush1.bf16.msra.mxu0 %v557
    %586 = vmatprep.subr.bf16.mxu0 0
    %587 = vmatpush1.bf16.msra.mxu0 %v556
    %588 = vmatprep.subr.bf16.mxu0 0
    %589 = vmatpush2.bf16.msra.mxu0 0
    %590 = vmatprep.subr.bf16.mxu0 0
    %591 = vmatpush2.bf16.msra.mxu0 0
    %592 = vmatprep.subr.bf16.mxu0 0
    %593 = vmatpush2.bf16.msra.mxu0 0
    %594 = vmatprep.subr.bf16.mxu0 0
    %595 = vmatpush2.bf16.msra.mxu0 0
    %596 = vmatprep.subr.bf16.mxu0 0
    %597 = vmatpush2.bf16.msra.mxu0 0
    %598 = vmatprep.subr.bf16.mxu0 0
    %599 = vmatpush2.bf16.msra.mxu0 0
    %600 = vmatprep.subr.bf16.mxu0 0
    %601 = vmatpush2.bf16.msra.mxu0 0
    %602 = vmatprep.subr.bf16.mxu0 0
    %603 = vmatpush2.bf16.msra.mxu0 0
    %604 = vmatprep.mubr.bf16.mxu0 0
    %605 = vmatmul.mubr.bf16.gmra.mxu0 %v501
    %v606 = vpop.f32.mrf.mxu0
    %v607 = vadd.f32 %v523, %v606
    %v608 = vpop.f32.mrf.mxu0
    %v609 = vpop.f32.mrf.mxu0
    %v610 = vpop.f32.mrf.mxu0
    %611 = vdwg.mxu0
    %613 = vrot.lane.b32.xlu0 %v607, 127
    %v614 = vpop.permute.xlu0 %613
    %v616 = vsub.f32 %v607, %v614
    %v617 = vmul.f32 %v616, 1.442695
    %v618 = vpow.pop %v617
    %v619 = vadd.f32 %v618, 1.0
    %v620 = vrcp.pop %v619
    %v621 = vsub.f32 1.0, %v620
    %v622 = vlaneseq
    %v623 = vand.u32 %v622, 127
    %vm624 = vcmp.eq.s32.totalorder %v623, 0
    %vm625 = vcmp.eq.s32.totalorder %v623, 1
    %627 = vset.pattern.permute.xlu0 0
    %628 = vperm.xlu0 %627, %v620
    %v629 = vpop.permute.xlu0 %628
    %v631 = vsel %vm625, %v629, 0.0
    %633 = vset.pattern.permute.xlu0 0
    %634 = vperm.xlu0 %633, %v621
    %v635 = vpop.permute.xlu0 %634
    %v637 = vsel %vm624, %v635, %v631
    %638 = vst [vmem:[#allocation8] sm:$0xff] %v637
    // Predicated region
    $region26: #{tpu_custom_call.1} parent=1 // pred_check
      _
    $region27: #{tpu_custom_call.1} parent=1 // pred_check_branch
      %640 = sbr.rel (0) target = $region29
    $region28: #{tpu_custom_call.1} parent=1 // pred_region
      %s642 = ssub.s32 128, 128
      %643 = vsyncadd [#allocation4], %s642
      %s645 = sshll.u32 [#allocation8], 4
      %s646 = int_to_ptr.vmem [resolvable:$true] %s645
      %648 = dma.vmem_to_hbm [thread:$0]  %s646, 128, %s3, [#allocation4]
    $region29: #{tpu_custom_call.1} parent=1 // pred_fallthru
      _
    // Predicated region
    $region30: #{tpu_custom_call.1} parent=1 // pred_check
      _
    $region31: #{tpu_custom_call.1} parent=1 // pred_check_branch
      %650 = sbr.rel (0) target = $region33
    $region32: #{tpu_custom_call.1} parent=1 // pred_region
      %651 = dma.done [#allocation4], 128
    $region33: #{tpu_custom_call.1} parent=1 // pred_fallthru
      _
    %652 = vsyncpa [#allocation3], 1
    %653 = vsyncpa [#allocation6], 1
    %654 = vsyncpa [#allocation4], 1

</llo_original>
